<compile_context>
chip_gen: v5e
topology: v5e:2x2
jax: 0.10.0
libtpu: 0.0.40
codegen_flags: <defaults>
</compile_context>

<pallas_src>
import functools

import jax
import jax.numpy as jnp
from jax.experimental import pallas as pl
from jax.experimental.pallas import tpu as pltpu


def _soft_label_smoothing_kernel(out_ref, tgt_ref, loss_ref, *,
                                 classes, smoothing, use_target):
    """out_ref: (Tn, C) logits (native dtype), tgt_ref: (Tn, 1) i32 labels,
    loss_ref: (Tn, 1) f32 per-row loss (before the batch mean)."""
    x = out_ref[...].astype(jnp.float32)               # in-kernel cast (bf16 ok)
    tgt = tgt_ref[...]                                  # (Tn, 1) int32

    # Numerically-stable softmax pieces along the class (lane) axis.
    m = jnp.max(x, axis=-1, keepdims=True)              # (Tn, 1)
    xm = x - m                                          # (Tn, C)
    e = jnp.exp(xm)                                     # (Tn, C)  EUP-dominant
    s = jnp.sum(e, axis=-1, keepdims=True)              # (Tn, 1)
    log_s = jnp.log(s)                                  # (Tn, 1)
    inv_s = pl.reciprocal(s, approx=False)              # exact; feeds scale_val

    # log-softmax at the target column: iota + compare + one masked cross-lane
    # reduce of xm (replaces the scatter_ in the PyTorch reference).
    col = jax.lax.broadcasted_iota(jnp.int32, x.shape, 1)
    xm_t = jnp.sum(jnp.where(col == tgt, xm, 0.0), axis=-1, keepdims=True)
    log_p_t = xm_t - log_s                               # (Tn, 1)

    confidence = 1.0 - smoothing
    fill = smoothing / (classes - 1)

    # NOTE: `smoothing` is a static Python float; the kernel is specialized on
    # it (mirrors the PyTorch `if self.smoothing:` branch).
    if smoothing:
        p_t = jnp.exp(xm_t) * inv_s                      # softmax at target, per-row
        sum_xm = jnp.sum(xm, axis=-1, keepdims=True)     # (Tn, 1)
        sum_e_xm = jnp.sum(e * xm, axis=-1, keepdims=True)
        sum_L = sum_xm - classes * log_s                 # sum_j log softmax_j
        sum_pL = sum_e_xm * inv_s - log_s                # sum_j p_j * log softmax_j
        per_row = (-fill * (sum_L + sum_pL)
                   - (confidence - fill) * (1.0 + p_t) * log_p_t)
    else:
        # fill == 0, confidence == 1  ->  loss row is exactly -log softmax[target]
        p_t = None
        per_row = -log_p_t

    if use_target:
        scale_val = jnp.exp(xm_t) * inv_s if p_t is None else p_t
    else:
        # max(softmax) == exp(max(xm)) / s == 1 / s exactly, since max(xm) == 0.
        scale_val = inv_s

    loss_ref[...] = per_row * (1.0 + scale_val)


def _pick_tile_n(n, dtype):
    """Row tile: big enough to amortize the ~0.35us grid-step cost, capped so
    large batches still give v7x's two TensorCores >=2 steps each, and kept a
    multiple of 8 sublanes (or equal to the full batch)."""
    del dtype  # post-fold, VMEM is bound by f32 temporaries, not input dtype
    base = 2048
    if n <= 512:
        return n                         # single block (block dim == array dim)
    tile = min(base, max(512, pl.cdiv(n, 4)))
    tile = (tile + 7) // 8 * 8
    return min(tile, n)


def soft_label_smoothing_loss(output, target, *, classes=100, smoothing=0.0,
                              use_target=False, tile_n=None):
    """output: (N, C) float logits (f32 or bf16); target: (N,) int class ids.
    Returns the scalar mean loss (f32)."""
    n, c = output.shape
    assert c == classes
    target2d = target.astype(jnp.int32).reshape(n, 1)

    if tile_n is None:
        tile_n = _pick_tile_n(n, output.dtype)
    tile_n = min(tile_n, n)
    if tile_n < n:                       # sub-batch blocks must be 8-row aligned
        tile_n = max(8, (tile_n // 8) * 8)
    grid = (pl.cdiv(n, tile_n),)

    kernel = functools.partial(_soft_label_smoothing_kernel,
                               classes=classes,
                               smoothing=float(smoothing),
                               use_target=bool(use_target))

    per_row = pl.pallas_call(
        kernel,
        out_shape=jax.ShapeDtypeStruct((n, 1), jnp.float32),
        grid=grid,
        in_specs=[
            pl.BlockSpec((tile_n, c), lambda i: (i, 0)),   # logits, native dtype
            pl.BlockSpec((tile_n, 1), lambda i: (i, 0)),   # int32 labels
        ],
        out_specs=pl.BlockSpec((tile_n, 1), lambda i: (i, 0)),
        compiler_params=pltpu.CompilerParams(
            dimension_semantics=("parallel",),             # megacore on v7x
            # blocks (double-buffered, lane-padded) + full-tile f32 temporaries
            # ~12-14 MiB at tile_n=2048; 24 MiB fits every generation's budget.
            vmem_limit_bytes=24 * 1024 * 1024),
    )(output, target2d)

    # Final mean over N scalars: negligible vs the (N, C) input traffic.
    return jnp.mean(per_row)


def _reference(output, target, *, classes, smoothing, use_target):
    """Pure-JAX reference mirroring the PyTorch forward (f32 math)."""
    x = output.astype(jnp.float32)
    logits = jax.nn.softmax(x, axis=1)
    log_logits = jnp.log(logits)
    onehot = jax.nn.one_hot(target, classes, dtype=jnp.float32)
    smooth_target = (onehot * (1.0 - smoothing)
                     + (1.0 - onehot) * (smoothing / (classes - 1)))
    if smoothing:
        loss = jnp.sum((1.0 + logits) * (-smooth_target * log_logits), axis=-1)
    else:
        loss = jnp.sum(-smooth_target * log_logits, axis=-1)
    if use_target:
        scale_val = logits[jnp.arange(x.shape[0]), target]
    else:
        scale_val = jnp.max(logits, axis=1)
    return jnp.mean(loss * (1.0 + scale_val))


if __name__ == "__main__":
    key = jax.random.PRNGKey(0)
    k1, k2, k3, k4 = jax.random.split(key, 4)

    classes = 100

    # --- small single-tile case (smoothing branch on) ---
    batch = 8
    logits = jax.random.normal(k1, (batch, classes), dtype=jnp.float32)
    labels = jax.random.randint(k2, (batch,), 0, classes, dtype=jnp.int32)

    loss = soft_label_smoothing_loss(logits, labels, classes=classes,
                                     smoothing=0.1, use_target=False)
    loss = jax.block_until_ready(loss)
    ref = _reference(logits, labels, classes=classes, smoothing=0.1,
                     use_target=False)
    assert jnp.allclose(loss, ref, rtol=1e-4, atol=1e-5), (loss, ref)

    # target=True / smoothing=0.0 branch.
    loss2 = soft_label_smoothing_loss(logits, labels, classes=classes,
                                      smoothing=0.0, use_target=True)
    ref2 = _reference(logits, labels, classes=classes, smoothing=0.0,
                      use_target=True)
    assert jnp.allclose(jax.block_until_ready(loss2), ref2,
                        rtol=1e-4, atol=1e-5), (loss2, ref2)

    # bf16 logits stay bf16 through HBM; cast happens inside the kernel.
    logits_bf16 = logits.astype(jnp.bfloat16)
    loss3 = soft_label_smoothing_loss(logits_bf16, labels, classes=classes,
                                      smoothing=0.1, use_target=True)
    ref3 = _reference(logits_bf16, labels, classes=classes, smoothing=0.1,
                      use_target=True)
    assert jnp.allclose(jax.block_until_ready(loss3), ref3,
                        rtol=1e-4, atol=1e-5), (loss3, ref3)

    # Multi-tile grid with a partial trailing block (exercises the auto tile
    # picker, row tiling and the parallel grid axis; rows are independent so
    # the clipped writeback of the padded trailing rows is safe).
    batch_l = 1030
    logits_l = jax.random.normal(k3, (batch_l, classes), dtype=jnp.float32)
    labels_l = jax.random.randint(k4, (batch_l,), 0, classes, dtype=jnp.int32)
    loss4 = soft_label_smoothing_loss(logits_l, labels_l, classes=classes,
                                      smoothing=0.1, use_target=False)
    ref4 = _reference(logits_l, labels_l, classes=classes, smoothing=0.1,
                      use_target=False)
    assert jnp.allclose(jax.block_until_ready(loss4), ref4,
                        rtol=1e-4, atol=1e-5), (loss4, ref4)

    print("KERNEL_OK")
</pallas_src>

<mosaic_0001>
module attributes {stable_mosaic.version = 11 : i64} {
  func.func @_soft_label_smoothing_kernel(%arg0: i32, %arg1: memref<8x100xf32, #tpu.memory_space<vmem>>, %arg2: memref<8x1xi32, #tpu.memory_space<vmem>>, %arg3: memref<8x1xf32, #tpu.memory_space<vmem>>) attributes {dimension_semantics = [#tpu.dimension_semantics<parallel>], iteration_bounds = array<i64: 1>, scalar_prefetch = 0 : i64, scratch_operands = 0 : i64, tpu.core_type = #tpu.core_type<tc>, window_params = [{transform_indices = @transform_0, window_bounds = array<i64: 8, 100>}, {transform_indices = @transform_1, window_bounds = array<i64: 8, 1>}, {transform_indices = @transform_2, window_bounds = array<i64: 8, 1>}]} {
    %c0 = arith.constant 0 : index
    %c0_0 = arith.constant 0 : index
    %0 = vector.load %arg1[%c0, %c0_0] : memref<8x100xf32, #tpu.memory_space<vmem>>, vector<8x100xf32>
    %c0_1 = arith.constant 0 : index
    %c0_2 = arith.constant 0 : index
    %1 = vector.load %arg2[%c0_1, %c0_2] : memref<8x1xi32, #tpu.memory_space<vmem>>, vector<8x1xi32>
    %cst = arith.constant dense<0xFF800000> : vector<8xf32>
    %2 = vector.multi_reduction <maximumf>, %0, %cst [1] : vector<8x100xf32> to vector<8xf32>
    %3 = vector.shape_cast %2 : vector<8xf32> to vector<8x1xf32>
    %4 = vector.broadcast %3 : vector<8x1xf32> to vector<8x100xf32>
    %5 = arith.subf %0, %4 : vector<8x100xf32>
    %6 = math.exp %5 : vector<8x100xf32>
    %cst_3 = arith.constant dense<0.000000e+00> : vector<8xf32>
    %7 = vector.multi_reduction <add>, %6, %cst_3 [1] : vector<8x100xf32> to vector<8xf32>
    %8 = vector.shape_cast %7 : vector<8xf32> to vector<8x1xf32>
    %9 = math.log %8 : vector<8x1xf32>
    %10 = tpu.reciprocal %8 : vector<8x1xf32> -> vector<8x1xf32>
    %11 = tpu.iota {dimensions = array<i32: 1>} : vector<8x100xi32>
    %12 = vector.broadcast %1 : vector<8x1xi32> to vector<8x100xi32>
    %13 = arith.cmpi eq, %11, %12 : vector<8x100xi32>
    %cst_4 = arith.constant 0.000000e+00 : f32
    %14 = vector.broadcast %cst_4 : f32 to vector<8x100xf32>
    %15 = arith.select %13, %5, %14 : vector<8x100xi1>, vector<8x100xf32>
    %cst_5 = arith.constant dense<0.000000e+00> : vector<8xf32>
    %16 = vector.multi_reduction <add>, %15, %cst_5 [1] : vector<8x100xf32> to vector<8xf32>
    %17 = vector.shape_cast %16 : vector<8xf32> to vector<8x1xf32>
    %18 = arith.subf %17, %9 : vector<8x1xf32>
    %19 = math.exp %17 : vector<8x1xf32>
    %20 = arith.mulf %19, %10 : vector<8x1xf32>
    %cst_6 = arith.constant dense<0.000000e+00> : vector<8xf32>
    %21 = vector.multi_reduction <add>, %5, %cst_6 [1] : vector<8x100xf32> to vector<8xf32>
    %22 = vector.shape_cast %21 : vector<8xf32> to vector<8x1xf32>
    %23 = arith.mulf %6, %5 : vector<8x100xf32>
    %cst_7 = arith.constant dense<0.000000e+00> : vector<8xf32>
    %24 = vector.multi_reduction <add>, %23, %cst_7 [1] : vector<8x100xf32> to vector<8xf32>
    %25 = vector.shape_cast %24 : vector<8xf32> to vector<8x1xf32>
    %cst_8 = arith.constant 1.000000e+02 : f32
    %26 = vector.broadcast %cst_8 : f32 to vector<8x1xf32>
    %27 = arith.mulf %26, %9 : vector<8x1xf32>
    %28 = arith.subf %22, %27 : vector<8x1xf32>
    %29 = arith.mulf %25, %10 : vector<8x1xf32>
    %30 = arith.subf %29, %9 : vector<8x1xf32>
    %31 = arith.addf %28, %30 : vector<8x1xf32>
    %cst_9 = arith.constant -0.00101010106 : f32
    %32 = vector.broadcast %cst_9 : f32 to vector<8x1xf32>
    %33 = arith.mulf %32, %31 : vector<8x1xf32>
    %cst_10 = arith.constant 1.000000e+00 : f32
    %34 = vector.broadcast %cst_10 : f32 to vector<8x1xf32>
    %35 = arith.addf %34, %20 : vector<8x1xf32>
    %cst_11 = arith.constant 0.898989916 : f32
    %36 = vector.broadcast %cst_11 : f32 to vector<8x1xf32>
    %37 = arith.mulf %36, %35 : vector<8x1xf32>
    %38 = arith.mulf %37, %18 : vector<8x1xf32>
    %39 = arith.subf %33, %38 : vector<8x1xf32>
    %cst_12 = arith.constant 1.000000e+00 : f32
    %40 = vector.broadcast %cst_12 : f32 to vector<8x1xf32>
    %41 = arith.addf %40, %10 : vector<8x1xf32>
    %42 = arith.mulf %39, %41 : vector<8x1xf32>
    %c0_13 = arith.constant 0 : index
    %c0_14 = arith.constant 0 : index
    %43 = vector.load %arg3[%c0_13, %c0_14] : memref<8x1xf32, #tpu.memory_space<vmem>>, vector<8x1xf32>
    tpu.vector_store %arg3[%c0_13, %c0_14], %42 {strides = array<i32>} : memref<8x1xf32, #tpu.memory_space<vmem>>, vector<8x1xf32>,
    return
  }
  func.func @transform_0(%arg0: i32) -> (i32, i32) {
    %c0_i32 = arith.constant 0 : i32
    %c0_i32_0 = arith.constant 0 : i32
    return %arg0, %c0_i32 : i32, i32
  }
  func.func @transform_1(%arg0: i32) -> (i32, i32) {
    %c0_i32 = arith.constant 0 : i32
    %c0_i32_0 = arith.constant 0 : i32
    return %arg0, %c0_i32 : i32, i32
  }
  func.func @transform_2(%arg0: i32) -> (i32, i32) {
    %c0_i32 = arith.constant 0 : i32
    %c0_i32_0 = arith.constant 0 : i32
    return %arg0, %c0_i32 : i32, i32
  }
}

</mosaic_0001>

<llo_original>
// kernel: tpu_custom_call.1
$region0: #{tpu_custom_call.1}
  #allocation0 [shape = 'u32[]', space=smem, size = 0x4, offset = 0x4, fixed_abs, tag = 'smem constant byte address 0x4 - core index']
  #allocation1 [shape = 'u32[72,128]{1,0:T(1,128)}', space=vmem, size = 0x9000, scoped, tag = 'internal scratch']
  %s0 = inlined_call_operand.vmem [shape: f32[8,100], index: 0, kind: input, shape index: {}]
  %s1 = inlined_call_operand.vmem [shape: s32[8,1], index: 1, kind: input, shape index: {}]
  %s2 = inlined_call_operand.vmem [shape: f32[8,1], index: 2, kind: output, shape index: {}]
  %s3 = sld [smem:[#allocation0]]
  $region18: #{tpu_custom_call.1} parent=0
    _
  %s5 = ssub.s32 1, %s3
  %s6 = scalar_select 0, %s5, %s3
  // Predicated region
  $region2: #{tpu_custom_call.1} parent=0 // pred_check
    _
  $region3: #{tpu_custom_call.1} parent=0 // pred_check_branch
    %8 = sbr.rel (0) target = $region5
  $region4: #{tpu_custom_call.1} parent=0 // pred_region
    _
  $region5: #{tpu_custom_call.1} parent=0 // pred_fallthru
    _
  // Predicated region
  $region6: #{tpu_custom_call.1} parent=0 // pred_check
    _
  $region7: #{tpu_custom_call.1} parent=0 // pred_check_branch
    %10 = sbr.rel (0) target = $region9
  $region8: #{tpu_custom_call.1} parent=0 // pred_region
    _
  $region9: #{tpu_custom_call.1} parent=0 // pred_fallthru
    _
  %v11 = vld [vmem:[%s0] sm:$0xff]
  %v12 = vld [vmem:[%s1] sm:$0xff]
  %vm13 = vcmask 818176
  %v14 = vsel %vm13, %v11, -inf
  %15 = vmax.xlane.f32.xlu0 %v14
  %v16 = vpop.xlane.xlu0 %15
  %v17 = vsub.f32 %v11, %v16
  %v18 = vmul.f32 %v17, 1.442695
  %v19 = vpow.pop %v18
  %v20 = vsel %vm13, %v19, 0.0
  %21 = vadd.xlane.f32.xlu0 %v20
  %v22 = vpop.xlane.xlu0 %21
  %v23 = vlog2.pop %v22
  %v24 = vmul.f32 %v23, 0.6931472
  %v25 = vrcp.pop %v22
  %v26 = vmul.f32 %v22, %v25
  %v27 = vsub.f32 1.0, %v26
  %v28 = vmul.f32 %v25, %v27
  %v29 = vadd.f32 %v25, %v28
  %vm30 = vweird.f32 %v22
  %vm31 = vweird.f32 %v25
  %vm32 = vmor %vm30, %vm31
  %v33 = vsel %vm32, %v25, %v29
  %v34 = vand.u32 2147483647, %v22
  %vm35 = vcmp.eq.f32.partialorder %v34, 8.507059e+37
  %v36 = vand.u32 %v22, 2147483648
  %v37 = vor.u32 1.1754944e-38, %v36
  %v38 = vsel %vm35, %v37, %v33
  %v39 = vlaneseq
  %v40 = vand.u32 %v39, 127
  %41 = vset.pattern.permute.xlu0 0
  %42 = vperm.xlu0 %41, %v12
  %v43 = vpop.permute.xlu0 %42
  %vm44 = vcmp.eq.s32.totalorder %v40, %v43
  %v45 = vsel %vm44, %v17, 0.0
  %v46 = vsel %vm13, %v45, 0.0
  %47 = vadd.xlane.f32.xlu0 %v46
  %v48 = vpop.xlane.xlu0 %47
  %v49 = vsub.f32 %v48, %v24
  %v50 = vmul.f32 %v48, 1.442695
  %v51 = vpow.pop %v50
  %v52 = vmul.f32 %v51, %v38
  %v53 = vsel %vm13, %v17, 0.0
  %54 = vadd.xlane.f32.xlu0 %v53
  %v55 = vpop.xlane.xlu0 %54
  %v56 = vmul.f32 %v19, %v17
  %v57 = vsel %vm13, %v56, 0.0
  %58 = vadd.xlane.f32.xlu0 %v57
  %v59 = vpop.xlane.xlu0 %58
  %v60 = vmul.f32 %v24, 100.0
  %v61 = vsub.f32 %v55, %v60
  %v62 = vmul.f32 %v59, %v38
  %v63 = vsub.f32 %v62, %v24
  %v64 = vadd.f32 %v61, %v63
  %v65 = vmul.f32 %v64, -0.001010101
  %v66 = vadd.f32 %v52, 1.0
  %v67 = vmul.f32 %v66, 0.8989899
  %v68 = vmul.f32 %v67, %v49
  %v69 = vsub.f32 %v65, %v68
  %v70 = vadd.f32 %v38, 1.0
  %v71 = vmul.f32 %v69, %v70
  %vm72 = vcmask 7168
  %73 = vst.msk [vmem:[%s2] sm:$0xff] %vm72, %v71
  // Predicated region
  $region10: #{tpu_custom_call.1} parent=0 // pred_check
    _
  $region11: #{tpu_custom_call.1} parent=0 // pred_check_branch
    %75 = sbr.rel (0) target = $region13
  $region12: #{tpu_custom_call.1} parent=0 // pred_region
    _
  $region13: #{tpu_custom_call.1} parent=0 // pred_fallthru
    _
  // Predicated region
  $region14: #{tpu_custom_call.1} parent=0 // pred_check
    _
  $region15: #{tpu_custom_call.1} parent=0 // pred_check_branch
    %77 = sbr.rel (0) target = $region17
  $region16: #{tpu_custom_call.1} parent=0 // pred_region
    _
  $region17: #{tpu_custom_call.1} parent=0 // pred_fallthru
    _

</llo_original>
